<compile_context>
chip_gen: v6e
topology: v6e:2x2x1
jax: 0.10.0
libtpu: 0.0.40
codegen_flags: <defaults>
</compile_context>

<pallas_src>
import math
from functools import partial

import jax
import jax.numpy as jnp
from jax.experimental import pallas as pl
from jax.experimental.pallas import tpu as pltpu


# ---------------------------------------------------------------------------
# Kernel: fused Fourier embedding + MLP for one tile of token rows.
# ---------------------------------------------------------------------------
def _ffn_kernel(apply_final_relu, *refs):
    # refs = (x, fB_t, W0c_t, W0s_t, b0, W1_t, b1, ..., Wk_t, bk, out)
    x_ref, fB_ref, w0c_ref, w0s_ref, b0_ref = refs[:5]
    out_ref = refs[-1]
    rest = refs[5:-1]
    num_rest = len(rest) // 2

    x = x_ref[...]                                              # (tm, d) f32

    # Fourier features. fB_ref already holds (2*pi*B)^T, shape (d, k).
    Bx = jnp.dot(x, fB_ref[...], preferred_element_type=jnp.float32)  # (tm, k)
    c = jnp.cos(Bx)
    s = jnp.sin(Bx)

    # First MLP layer, concat-free: [cos|sin] @ W0^T == cos@W0c + sin@W0s
    h = (jnp.dot(c, w0c_ref[...], preferred_element_type=jnp.float32)
         + jnp.dot(s, w0s_ref[...], preferred_element_type=jnp.float32)
         + b0_ref[...])
    h = jnp.maximum(h, 0.0)                                     # ReLU after layer 0

    # Remaining linear layers (hidden layers + output layer), pre-transposed.
    for li in range(num_rest):
        Wt = rest[2 * li][...]                                  # (in_f, out_f)
        b = rest[2 * li + 1][...]                               # (1, out_f)
        h = jnp.dot(h, Wt, preferred_element_type=jnp.float32) + b
        if (li < num_rest - 1) or apply_final_relu:
            h = jnp.maximum(h, 0.0)

    out_ref[...] = h.astype(out_ref.dtype)


# ---------------------------------------------------------------------------
# Wrapper (jitted; all layout shuffles fold into the XLA program)
# ---------------------------------------------------------------------------
@partial(jax.jit, static_argnames=("outermost_linear", "tm"))
def ffn_forward(coords, fourier_B, weights, biases, *, outermost_linear=False,
                tm=1024):
    """coords: (B, N, in_features). Returns (output (B, N, out_features), coords)."""
    Bsz, N, d = coords.shape
    M = Bsz * N
    k = fourier_B.shape[0]
    H = weights[0].shape[0]
    out_features = weights[-1].shape[0]

    # --- tile choice: big row tile, multiple of 8, never hugely > M --------
    tm = int(tm)
    tm = max(8, min(tm, pl.cdiv(M, 8) * 8))
    tm = (tm // 8) * 8
    M_pad = pl.cdiv(M, tm) * tm

    x2d = coords.reshape(M, d).astype(jnp.float32)
    if M_pad != M:
        x2d = jnp.pad(x2d, ((0, M_pad - M), (0, 0)))

    # --- host-side weight prep (all layout shuffles hoisted out of kernel) --
    two_pi = jnp.float32(2.0 * math.pi)
    fB_t = (two_pi * fourier_B.astype(jnp.float32)).T           # (d, k)
    W0 = weights[0].astype(jnp.float32)                         # (H, 2k)
    W0c_t = W0[:, :k].T                                         # (k, H)
    W0s_t = W0[:, k:].T                                         # (k, H)
    b0 = biases[0].astype(jnp.float32).reshape(1, -1)           # (1, H)
    rest_w = [W.astype(jnp.float32).T for W in weights[1:]]     # (in_f, out_f)
    rest_b = [b.astype(jnp.float32).reshape(1, -1) for b in biases[1:]]

    operands = [x2d, fB_t, W0c_t, W0s_t, b0]
    in_specs = [
        pl.BlockSpec((tm, d), lambda i: (i, 0)),                # x tile
        pl.BlockSpec(fB_t.shape, lambda i: (0, 0)),             # constant blocks
        pl.BlockSpec(W0c_t.shape, lambda i: (0, 0)),
        pl.BlockSpec(W0s_t.shape, lambda i: (0, 0)),
        pl.BlockSpec(b0.shape, lambda i: (0, 0)),
    ]
    for Wt, b in zip(rest_w, rest_b):
        operands.append(Wt)
        operands.append(b)
        in_specs.append(pl.BlockSpec(Wt.shape, lambda i: (0, 0)))
        in_specs.append(pl.BlockSpec(b.shape, lambda i: (0, 0)))

    # --- cost estimate (hint for XLA scheduling around the custom call) ----
    num_hidden = max(0, len(weights) - 2)
    flops = int(2 * M * (d * k + 2 * k * H + H * H * num_hidden + H * out_features))
    transcendentals = int(2 * M * k)
    bytes_accessed = int(4 * (M * (d + out_features)
                              + fourier_B.size
                              + sum(int(W.size) for W in weights)
                              + sum(int(b.size) for b in biases)))
    cost = pl.CostEstimate(flops=flops, transcendentals=transcendentals,
                           bytes_accessed=bytes_accessed)

    out2d = pl.pallas_call(
        partial(_ffn_kernel, not outermost_linear),
        out_shape=jax.ShapeDtypeStruct((M_pad, out_features), coords.dtype),
        grid=(M_pad // tm,),
        in_specs=in_specs,
        out_specs=pl.BlockSpec((tm, out_features), lambda i: (i, 0)),
        compiler_params=pltpu.CompilerParams(
            dimension_semantics=("parallel",)),
        cost_estimate=cost,
    )(*operands)

    output = out2d[:M].reshape(Bsz, N, out_features)
    # TODO(synk): the PyTorch module returns coords with requires_grad_(True)
    # for autograd bookkeeping; there is no Pallas equivalent, coords is
    # returned unchanged.
    return output, coords


# ---------------------------------------------------------------------------
# Deterministic parameter construction (mirrors module __init__ shapes)
# ---------------------------------------------------------------------------
def init_ffn_params(key, in_features, out_features, fourier_features, sigma,
                    hidden_features, num_hidden_layers):
    keys = jax.random.split(key, 2 + 2 * (num_hidden_layers + 2))
    kidx = 0

    # FourierEmbedding.B : (fourier_features, in_features), N(0, sigma^2)
    fourier_B = sigma * jax.random.normal(
        keys[kidx], (fourier_features, in_features), dtype=jnp.float32)
    kidx += 1

    # MLP linear layers: kaiming-normal (fan_in, relu) weights, small uniform bias
    layer_dims = [(fourier_features * 2, hidden_features)]
    for _ in range(num_hidden_layers):
        layer_dims.append((hidden_features, hidden_features))
    layer_dims.append((hidden_features, out_features))

    weights, biases = [], []
    for (fan_in, fan_out) in layer_dims:
        std = math.sqrt(2.0 / fan_in)  # kaiming normal, a=0, relu, fan_in
        W = std * jax.random.normal(keys[kidx], (fan_out, fan_in),
                                    dtype=jnp.float32)
        kidx += 1
        bound = 1.0 / math.sqrt(fan_in)
        b = jax.random.uniform(keys[kidx], (fan_out,), dtype=jnp.float32,
                               minval=-bound, maxval=bound)
        kidx += 1
        weights.append(W)
        biases.append(b)

    return fourier_B, weights, biases


if __name__ == "__main__":
    # Small shapes consistent with the module's forward (coords: (B, N, d))
    batch, seq, in_features = 2, 8, 3
    fourier_features = 16
    sigma = 1.0
    hidden_features = 32
    num_hidden_layers = 1
    out_features = 4
    outermost_linear = False

    key = jax.random.PRNGKey(0)
    pkey, xkey = jax.random.split(key)
    fourier_B, weights, biases = init_ffn_params(
        pkey, in_features, out_features, fourier_features, sigma,
        hidden_features, num_hidden_layers)

    coords = jax.random.uniform(xkey, (batch, seq, in_features),
                                dtype=jnp.float32, minval=-1.0, maxval=1.0)

    output, coords_out = ffn_forward(
        coords, fourier_B, tuple(weights), tuple(biases),
        outermost_linear=outermost_linear, tm=1024)
    jax.block_until_ready(output)

    # sanity: compare against plain-JAX reference
    def ref_forward(x):
        Bx = jnp.einsum('bnd,kd->bnk', x, fourier_B)
        emb = jnp.concatenate([jnp.cos(2 * jnp.pi * Bx),
                               jnp.sin(2 * jnp.pi * Bx)], axis=-1)
        h = emb
        n = len(weights)
        for i, (W, b) in enumerate(zip(weights, biases)):
            h = jnp.einsum('bnf,of->bno', h, W) + b
            if (i < n - 1) or (not outermost_linear):
                h = jnp.maximum(h, 0.0)
        return h

    ref = ref_forward(coords)
    assert output.shape == (batch, seq, out_features)
    assert jnp.allclose(output, ref, atol=1e-4, rtol=1e-4)

    print("KERNEL_OK")
</pallas_src>

<mosaic_0001>
module attributes {stable_mosaic.version = 11 : i64} {
  func.func @_ffn_kernel(%arg0: i32, %arg1: memref<16x3xf32, #tpu.memory_space<vmem>>, %arg2: memref<3x16xf32, #tpu.memory_space<vmem>>, %arg3: memref<16x32xf32, #tpu.memory_space<vmem>>, %arg4: memref<16x32xf32, #tpu.memory_space<vmem>>, %arg5: memref<1x32xf32, #tpu.memory_space<vmem>>, %arg6: memref<32x32xf32, #tpu.memory_space<vmem>>, %arg7: memref<1x32xf32, #tpu.memory_space<vmem>>, %arg8: memref<32x4xf32, #tpu.memory_space<vmem>>, %arg9: memref<1x4xf32, #tpu.memory_space<vmem>>, %arg10: memref<16x4xf32, #tpu.memory_space<vmem>>) attributes {dimension_semantics = [#tpu.dimension_semantics<parallel>], iteration_bounds = array<i64: 1>, scalar_prefetch = 0 : i64, scratch_operands = 0 : i64, tpu.core_type = #tpu.core_type<tc>, window_params = [{transform_indices = @transform_0, window_bounds = array<i64: 16, 3>}, {pipeline_mode = #tpu.pipeline_mode<synchronous>, transform_indices = @transform_1, window_bounds = array<i64: 3, 16>}, {pipeline_mode = #tpu.pipeline_mode<synchronous>, transform_indices = @transform_2, window_bounds = array<i64: 16, 32>}, {pipeline_mode = #tpu.pipeline_mode<synchronous>, transform_indices = @transform_3, window_bounds = array<i64: 16, 32>}, {pipeline_mode = #tpu.pipeline_mode<synchronous>, transform_indices = @transform_4, window_bounds = array<i64: 1, 32>}, {pipeline_mode = #tpu.pipeline_mode<synchronous>, transform_indices = @transform_5, window_bounds = array<i64: 32, 32>}, {pipeline_mode = #tpu.pipeline_mode<synchronous>, transform_indices = @transform_6, window_bounds = array<i64: 1, 32>}, {pipeline_mode = #tpu.pipeline_mode<synchronous>, transform_indices = @transform_7, window_bounds = array<i64: 32, 4>}, {pipeline_mode = #tpu.pipeline_mode<synchronous>, transform_indices = @transform_8, window_bounds = array<i64: 1, 4>}, {transform_indices = @transform_9, window_bounds = array<i64: 16, 4>}]} {
    %c0 = arith.constant 0 : index
    %c0_0 = arith.constant 0 : index
    %0 = vector.load %arg1[%c0, %c0_0] : memref<16x3xf32, #tpu.memory_space<vmem>>, vector<16x3xf32>
    %c0_1 = arith.constant 0 : index
    %c0_2 = arith.constant 0 : index
    %1 = vector.load %arg2[%c0_1, %c0_2] : memref<3x16xf32, #tpu.memory_space<vmem>>, vector<3x16xf32>
    %cst = arith.constant dense<0.000000e+00> : vector<16x16xf32>
    %2 = tpu.matmul %0, %1, %cst {dimension_numbers = #tpu.dot_dimension_numbers<[1], [0], [0], [1], [0, 0, 1, 1], [], []>} : vector<16x3xf32>, vector<3x16xf32>, vector<16x16xf32> -> vector<16x16xf32>
    %3 = math.cos %2 : vector<16x16xf32>
    %4 = math.sin %2 : vector<16x16xf32>
    %c0_3 = arith.constant 0 : index
    %c0_4 = arith.constant 0 : index
    %5 = vector.load %arg3[%c0_3, %c0_4] : memref<16x32xf32, #tpu.memory_space<vmem>>, vector<16x32xf32>
    %cst_5 = arith.constant dense<0.000000e+00> : vector<16x32xf32>
    %6 = tpu.matmul %3, %5, %cst_5 {dimension_numbers = #tpu.dot_dimension_numbers<[1], [0], [0], [1], [0, 0, 1, 1], [], []>} : vector<16x16xf32>, vector<16x32xf32>, vector<16x32xf32> -> vector<16x32xf32>
    %c0_6 = arith.constant 0 : index
    %c0_7 = arith.constant 0 : index
    %7 = vector.load %arg4[%c0_6, %c0_7] : memref<16x32xf32, #tpu.memory_space<vmem>>, vector<16x32xf32>
    %cst_8 = arith.constant dense<0.000000e+00> : vector<16x32xf32>
    %8 = tpu.matmul %4, %7, %cst_8 {dimension_numbers = #tpu.dot_dimension_numbers<[1], [0], [0], [1], [0, 0, 1, 1], [], []>} : vector<16x16xf32>, vector<16x32xf32>, vector<16x32xf32> -> vector<16x32xf32>
    %9 = arith.addf %6, %8 : vector<16x32xf32>
    %c0_9 = arith.constant 0 : index
    %c0_10 = arith.constant 0 : index
    %10 = vector.load %arg5[%c0_9, %c0_10] : memref<1x32xf32, #tpu.memory_space<vmem>>, vector<1x32xf32>
    %11 = vector.broadcast %10 : vector<1x32xf32> to vector<16x32xf32>
    %12 = arith.addf %9, %11 : vector<16x32xf32>
    %cst_11 = arith.constant 0.000000e+00 : f32
    %13 = vector.broadcast %cst_11 : f32 to vector<16x32xf32>
    %14 = arith.maximumf %12, %13 : vector<16x32xf32>
    %c0_12 = arith.constant 0 : index
    %c0_13 = arith.constant 0 : index
    %15 = vector.load %arg6[%c0_12, %c0_13] : memref<32x32xf32, #tpu.memory_space<vmem>>, vector<32x32xf32>
    %c0_14 = arith.constant 0 : index
    %c0_15 = arith.constant 0 : index
    %16 = vector.load %arg7[%c0_14, %c0_15] : memref<1x32xf32, #tpu.memory_space<vmem>>, vector<1x32xf32>
    %cst_16 = arith.constant dense<0.000000e+00> : vector<16x32xf32>
    %17 = tpu.matmul %14, %15, %cst_16 {dimension_numbers = #tpu.dot_dimension_numbers<[1], [0], [0], [1], [0, 0, 1, 1], [], []>} : vector<16x32xf32>, vector<32x32xf32>, vector<16x32xf32> -> vector<16x32xf32>
    %18 = vector.broadcast %16 : vector<1x32xf32> to vector<16x32xf32>
    %19 = arith.addf %17, %18 : vector<16x32xf32>
    %cst_17 = arith.constant 0.000000e+00 : f32
    %20 = vector.broadcast %cst_17 : f32 to vector<16x32xf32>
    %21 = arith.maximumf %19, %20 : vector<16x32xf32>
    %c0_18 = arith.constant 0 : index
    %c0_19 = arith.constant 0 : index
    %22 = vector.load %arg8[%c0_18, %c0_19] : memref<32x4xf32, #tpu.memory_space<vmem>>, vector<32x4xf32>
    %c0_20 = arith.constant 0 : index
    %c0_21 = arith.constant 0 : index
    %23 = vector.load %arg9[%c0_20, %c0_21] : memref<1x4xf32, #tpu.memory_space<vmem>>, vector<1x4xf32>
    %cst_22 = arith.constant dense<0.000000e+00> : vector<16x4xf32>
    %24 = tpu.matmul %21, %22, %cst_22 {dimension_numbers = #tpu.dot_dimension_numbers<[1], [0], [0], [1], [0, 0, 1, 1], [], []>} : vector<16x32xf32>, vector<32x4xf32>, vector<16x4xf32> -> vector<16x4xf32>
    %25 = vector.broadcast %23 : vector<1x4xf32> to vector<16x4xf32>
    %26 = arith.addf %24, %25 : vector<16x4xf32>
    %cst_23 = arith.constant 0.000000e+00 : f32
    %27 = vector.broadcast %cst_23 : f32 to vector<16x4xf32>
    %28 = arith.maximumf %26, %27 : vector<16x4xf32>
    %c0_24 = arith.constant 0 : index
    %c0_25 = arith.constant 0 : index
    %29 = vector.load %arg10[%c0_24, %c0_25] : memref<16x4xf32, #tpu.memory_space<vmem>>, vector<16x4xf32>
    tpu.vector_store %arg10[%c0_24, %c0_25], %28 {strides = array<i32>} : memref<16x4xf32, #tpu.memory_space<vmem>>, vector<16x4xf32>,
    return
  }
  func.func @transform_0(%arg0: i32) -> (i32, i32) {
    %c0_i32 = arith.constant 0 : i32
    %c0_i32_0 = arith.constant 0 : i32
    return %arg0, %c0_i32 : i32, i32
  }
  func.func @transform_1(%arg0: i32) -> (i32, i32) {
    %c0_i32 = arith.constant 0 : i32
    %c0_i32_0 = arith.constant 0 : i32
    %c0_i32_1 = arith.constant 0 : i32
    return %c0_i32, %c0_i32_0 : i32, i32
  }
  func.func @transform_2(%arg0: i32) -> (i32, i32) {
    %c0_i32 = arith.constant 0 : i32
    %c0_i32_0 = arith.constant 0 : i32
    %c0_i32_1 = arith.constant 0 : i32
    return %c0_i32, %c0_i32_0 : i32, i32
  }
  func.func @transform_3(%arg0: i32) -> (i32, i32) {
    %c0_i32 = arith.constant 0 : i32
    %c0_i32_0 = arith.constant 0 : i32
    %c0_i32_1 = arith.constant 0 : i32
    return %c0_i32, %c0_i32_0 : i32, i32
  }
  func.func @transform_4(%arg0: i32) -> (i32, i32) {
    %c0_i32 = arith.constant 0 : i32
    %c0_i32_0 = arith.constant 0 : i32
    %c0_i32_1 = arith.constant 0 : i32
    return %c0_i32, %c0_i32_0 : i32, i32
  }
  func.func @transform_5(%arg0: i32) -> (i32, i32) {
    %c0_i32 = arith.constant 0 : i32
    %c0_i32_0 = arith.constant 0 : i32
    %c0_i32_1 = arith.constant 0 : i32
    return %c0_i32, %c0_i32_0 : i32, i32
  }
  func.func @transform_6(%arg0: i32) -> (i32, i32) {
    %c0_i32 = arith.constant 0 : i32
    %c0_i32_0 = arith.constant 0 : i32
    %c0_i32_1 = arith.constant 0 : i32
    return %c0_i32, %c0_i32_0 : i32, i32
  }
  func.func @transform_7(%arg0: i32) -> (i32, i32) {
    %c0_i32 = arith.constant 0 : i32
    %c0_i32_0 = arith.constant 0 : i32
    %c0_i32_1 = arith.constant 0 : i32
    return %c0_i32, %c0_i32_0 : i32, i32
  }
  func.func @transform_8(%arg0: i32) -> (i32, i32) {
    %c0_i32 = arith.constant 0 : i32
    %c0_i32_0 = arith.constant 0 : i32
    %c0_i32_1 = arith.constant 0 : i32
    return %c0_i32, %c0_i32_0 : i32, i32
  }
  func.func @transform_9(%arg0: i32) -> (i32, i32) {
    %c0_i32 = arith.constant 0 : i32
    %c0_i32_0 = arith.constant 0 : i32
    return %arg0, %c0_i32 : i32, i32
  }
}

</mosaic_0001>

<llo_original>
// kernel: ffn_forward.1
$region0: #{ffn_forward.1}
  #allocation0 [shape = 'u32[]', space=smem, size = 0x4, offset = 0x4, fixed_abs, tag = 'smem constant byte address 0x4 - core index']
  #allocation1 [shape = 'u32[144,128]{1,0:T(1,128)}', space=vmem, size = 0x12000, scoped, tag = 'internal scratch']
  %s0 = inlined_call_operand.vmem [shape: f32[16,3], index: 0, kind: input, shape index: {}]
  %s1 = inlined_call_operand.vmem [shape: f32[3,16], index: 1, kind: input, shape index: {}]
  %s2 = inlined_call_operand.vmem [shape: f32[16,32], index: 2, kind: input, shape index: {}]
  %s3 = inlined_call_operand.vmem [shape: f32[16,32], index: 3, kind: input, shape index: {}]
  %s4 = inlined_call_operand.vmem [shape: f32[1,32], index: 4, kind: input, shape index: {}]
  %s5 = inlined_call_operand.vmem [shape: f32[32,32], index: 5, kind: input, shape index: {}]
  %s6 = inlined_call_operand.vmem [shape: f32[1,32], index: 6, kind: input, shape index: {}]
  %s7 = inlined_call_operand.vmem [shape: f32[32,4], index: 7, kind: input, shape index: {}]
  %s8 = inlined_call_operand.vmem [shape: f32[1,4], index: 8, kind: input, shape index: {}]
  %s9 = inlined_call_operand.vmem [shape: f32[16,4], index: 9, kind: output, shape index: {}]
  %s10 = sld [smem:[#allocation0]]
  $region46: #{ffn_forward.1} parent=0
    _
  %s12 = ssub.s32 1, %s10
  %s13 = scalar_select 0, %s12, %s10
  // Predicated region
  $region2: #{ffn_forward.1} parent=0 // pred_check
    _
  $region3: #{ffn_forward.1} parent=0 // pred_check_branch
    %15 = sbr.rel (0) target = $region5
  $region4: #{ffn_forward.1} parent=0 // pred_region
    _
  $region5: #{ffn_forward.1} parent=0 // pred_fallthru
    _
  // Predicated region
  $region6: #{ffn_forward.1} parent=0 // pred_check
    _
  $region7: #{ffn_forward.1} parent=0 // pred_check_branch
    %17 = sbr.rel (0) target = $region9
  $region8: #{ffn_forward.1} parent=0 // pred_region
    _
  $region9: #{ffn_forward.1} parent=0 // pred_fallthru
    _
  // Predicated region
  $region10: #{ffn_forward.1} parent=0 // pred_check
    _
  $region11: #{ffn_forward.1} parent=0 // pred_check_branch
    %19 = sbr.rel (0) target = $region13
  $region12: #{ffn_forward.1} parent=0 // pred_region
    _
  $region13: #{ffn_forward.1} parent=0 // pred_fallthru
    _
  // Predicated region
  $region14: #{ffn_forward.1} parent=0 // pred_check
    _
  $region15: #{ffn_forward.1} parent=0 // pred_check_branch
    %21 = sbr.rel (0) target = $region17
  $region16: #{ffn_forward.1} parent=0 // pred_region
    _
  $region17: #{ffn_forward.1} parent=0 // pred_fallthru
    _
  // Predicated region
  $region18: #{ffn_forward.1} parent=0 // pred_check
    _
  $region19: #{ffn_forward.1} parent=0 // pred_check_branch
    %23 = sbr.rel (0) target = $region21
  $region20: #{ffn_forward.1} parent=0 // pred_region
    _
  $region21: #{ffn_forward.1} parent=0 // pred_fallthru
    _
  // Predicated region
  $region22: #{ffn_forward.1} parent=0 // pred_check
    _
  $region23: #{ffn_forward.1} parent=0 // pred_check_branch
    %25 = sbr.rel (0) target = $region25
  $region24: #{ffn_forward.1} parent=0 // pred_region
    _
  $region25: #{ffn_forward.1} parent=0 // pred_fallthru
    _
  // Predicated region
  $region26: #{ffn_forward.1} parent=0 // pred_check
    _
  $region27: #{ffn_forward.1} parent=0 // pred_check_branch
    %27 = sbr.rel (0) target = $region29
  $region28: #{ffn_forward.1} parent=0 // pred_region
    _
  $region29: #{ffn_forward.1} parent=0 // pred_fallthru
    _
  // Predicated region
  $region30: #{ffn_forward.1} parent=0 // pred_check
    _
  $region31: #{ffn_forward.1} parent=0 // pred_check_branch
    %29 = sbr.rel (0) target = $region33
  $region32: #{ffn_forward.1} parent=0 // pred_region
    _
  $region33: #{ffn_forward.1} parent=0 // pred_fallthru
    _
  // Predicated region
  $region34: #{ffn_forward.1} parent=0 // pred_check
    _
  $region35: #{ffn_forward.1} parent=0 // pred_check_branch
    %31 = sbr.rel (0) target = $region37
  $region36: #{ffn_forward.1} parent=0 // pred_region
    _
  $region37: #{ffn_forward.1} parent=0 // pred_fallthru
    _
  %v32 = vld [vmem:[%s0] sm:$0xff]
  %v33 = vld [vmem:[%s0 + $0x8] sm:$0xff]
  %v34 = vld [vmem:[%s1] sm:$0x7]
  %vm35 = vcmask 23552
  %v37 = vsel %vm35, %v32, 0
  %v40 = vsel %vm35, %v33, 0
  %vm42 = vcmask 1042432
  %v44 = vsel %vm42, %v34, 0
  %46 = vmatprep.subr.mxu0 0.0
  %47 = vmatpush1.msra.mxu0 0.0
  %48 = vmatprep.subr.mxu0 0.0
  %49 = vmatpush1.msra.mxu0 0.0
  %50 = vmatprep.subr.mxu0 0.0
  %51 = vmatpush1.msra.mxu0 0.0
  %52 = vmatprep.subr.mxu0 0.0
  %53 = vmatpush1.msra.mxu0 0.0
  %54 = vmatprep.subr.mxu0 0.0
  %55 = vmatpush1.msra.mxu0 0.0
  %56 = vmatprep.subr.mxu0 0.0
  %57 = vmatpush1.msra.mxu0 0.0
  %58 = vmatprep.subr.mxu0 0.0
  %59 = vmatpush1.msra.mxu0 0.0
  %60 = vmatprep.subr.mxu0 0.0
  %61 = vmatpush1.msra.mxu0 0.0
  %62 = vmatprep.subr.mxu0 0.0
  %63 = vmatpush1.msra.mxu0 0.0
  %64 = vmatprep.subr.mxu0 0.0
  %65 = vmatpush1.msra.mxu0 0.0
  %66 = vmatprep.subr.mxu0 0.0
  %67 = vmatpush1.msra.mxu0 0.0
  %68 = vmatprep.subr.mxu0 0.0
  %69 = vmatpush1.msra.mxu0 0.0
  %70 = vmatprep.subr.mxu0 0.0
  %71 = vmatpush1.msra.mxu0 0.0
  %72 = vmatprep.subr.mxu0 0.0
  %73 = vmatpush1.msra.mxu0 0.0
  %74 = vmatprep.subr.mxu0 0.0
  %75 = vmatpush1.msra.mxu0 0.0
  %76 = vmatprep.subr.mxu0 0.0
  %77 = vmatpush1.msra.mxu0 %v44
  %78 = vmatprep.subr.mxu0 0.0
  %79 = vmatpush2.msra.mxu0 0.0
  %80 = vmatprep.subr.mxu0 0.0
  %81 = vmatpush2.msra.mxu0 0.0
  %82 = vmatprep.subr.mxu0 0.0
  %83 = vmatpush2.msra.mxu0 0.0
  %84 = vmatprep.subr.mxu0 0.0
  %85 = vmatpush2.msra.mxu0 0.0
  %86 = vmatprep.subr.mxu0 0.0
  %87 = vmatpush2.msra.mxu0 0.0
  %88 = vmatprep.subr.mxu0 0.0
  %89 = vmatpush2.msra.mxu0 0.0
  %90 = vmatprep.subr.mxu0 0.0
  %91 = vmatpush2.msra.mxu0 0.0
  %92 = vmatprep.subr.mxu0 0.0
  %93 = vmatpush2.msra.mxu0 0.0
  %94 = vmatprep.subr.mxu0 0.0
  %95 = vmatpush2.msra.mxu0 0.0
  %96 = vmatprep.subr.mxu0 0.0
  %97 = vmatpush2.msra.mxu0 0.0
  %98 = vmatprep.subr.mxu0 0.0
  %99 = vmatpush2.msra.mxu0 0.0
  %100 = vmatprep.subr.mxu0 0.0
  %101 = vmatpush2.msra.mxu0 0.0
  %102 = vmatprep.subr.mxu0 0.0
  %103 = vmatpush2.msra.mxu0 0.0
  %104 = vmatprep.subr.mxu0 0.0
  %105 = vmatpush2.msra.mxu0 0.0
  %106 = vmatprep.subr.mxu0 0.0
  %107 = vmatpush2.msra.mxu0 0.0
  %108 = vmatprep.subr.mxu0 0.0
  %109 = vmatpush2.msra.mxu0 0.0
  %110 = vmatprep.mubr.f32.mxu0 0.0
  %111 = vmatmul.mubr.f32.gmra.mxu0 %v37
  %v112 = vpop.f32.mrf.mxu0
  %v113 = vadd.f32 0.0, %v112
  %v114 = vpop.f32.mrf.mxu0
  %115 = vmatprep.mubr.f32.mxu0 0.0
  %116 = vmatmul.mubr.f32.gmra.mxu0 %v40
  %v117 = vpop.f32.mrf.mxu0
  %v118 = vadd.f32 0.0, %v117
  %v119 = vpop.f32.mrf.mxu0
  %120 = vdwg.mxu0
  %v121 = vand.u32 2147483647, %v113
  %vm122 = vcmp.le.f32.partialorder %v121, 0.7853982
  %vm123 = vcmp.lt.s32.totalorder %v113, 0
  %v124 = vand.u32 %v113, 2139095040
  %v125 = vshrl.u32 %v124, 23
  %v126 = vsub.s32 %v125, 127
  %v127 = vand.u32 2147483647, %v113
  %v128 = vand.u32 %v127, 8388607
  %v129 = vor.u32 %v128, 8388608
  %v130 = vsub.s32 0, %v129
  %v131 = vadd.s32 %v126, 1
  %vm132 = vcmp.gt.s32.totalorder %v131, 0
  %v133 = vsel %vm132, %v131, 0
  %v134 = vshrl.u32 %v133, 5
  %v135 = vand.u32 %v133, 31
  %v136 = vsub.s32 32, %v135
  %v137 = vshrl.u32 683565275, %v136
  %v138 = vshll.u32 683565275, %v135
  %v139 = vshrl.u32 2475754826, %v136
  %v140 = vor.u32 %v138, %v139
  %v141 = vshll.u32 2475754826, %v135
  %v142 = vshrl.u32 2131351028, %v136
  %v143 = vor.u32 %v141, %v142
  %v144 = vshll.u32 2131351028, %v135
  %v145 = vshrl.u32 2102212464, %v136
  %v146 = vor.u32 %v144, %v145
  %v147 = vshll.u32 2102212464, %v135
  %v148 = vshrl.u32 920167782, %v136
  %v149 = vor.u32 %v147, %v148
  %v150 = vshll.u32 920167782, %v135
  %v151 = vshrl.u32 1326507024, %v136
  %v152 = vor.u32 %v150, %v151
  %vm153 = vcmp.lt.s32.totalorder %v134, 1
  %vm154 = vcmp.lt.s32.totalorder %v134, 2
  %vm155 = vcmp.lt.s32.totalorder %v134, 3
  %vm156 = vcmp.lt.s32.totalorder %v134, 4
  %v157 = vsel %vm153, %v137, %v140
  %v158 = vsel %vm156, %v146, 2102212464
  %v159 = vsel %vm155, %v143, %v158
  %v160 = vsel %vm154, %v157, %v159
  %v161 = vsel %vm153, %v140, %v143
  %v162 = vsel %vm156, %v149, 920167782
  %v163 = vsel %vm155, %v146, %v162
  %v164 = vsel %vm154, %v161, %v163
  %v165 = vsel %vm153, %v143, %v146
  %v166 = vsel %vm156, %v152, 1326507024
  %v167 = vsel %vm155, %v149, %v166
  %v168 = vsel %vm154, %v165, %v167
  %v169 = vshll.u32 %v129, 8
  %v170 = vmul.u32.u64.compose %v169, %v168
  %v171 = vextract.low.u32 %v170
  %v172 = vextract.high.u32 %v170
  %v173 = vmul.u32.u64.compose %v169, %v164
  %v174 = vextract.low.u32 %v173
  %v175 = vextract.high.u32 %v173
  %v176 = vmul.u32 %v169, %v160
  %v177 = vadd.s32 %v172, %v174
  %vm178 = vc.u32 %v172, %v174
  %v179 = vadd.s32 %v175, 1
  %v180 = vsel %vm178, %v179, %v175
  %v181 = vadd.s32 %v176, %v180
  %v182 = vadd.s32 %v181, 536870912
  %v183 = vshrl.u32 %v182, 30
  %v184 = vshll.u32 %v183, 30
  %v185 = vsub.s32 %v181, %v184
  %vm186 = vcmp.lt.s32.totalorder %v185, 0
  %v187 = vsub.s32 0, %v185
  %v188 = vsel %vm186, %v187, %v185
  %v189 = vclz %v188
  %v190 = vsub.s32 %v189, 2
  %vm191 = vcmp.gt.s32.totalorder 0, %v190
  %v192 = vsel %vm191, 0, %v190
  %v193 = vsub.s32 32, %v192
  %v194 = vshll.u32 %v185, %v192
  %v195 = vshrl.u32 %v177, %v193
  %v196 = vor.u32 %v194, %v195
  %v197 = vsub.s32 4294967266, %v192
  %v198 = vadd.s32 %v197, 127
  %v199 = vshll.u32 %v198, 23
  %v200 = vor.u32 4788187, %v199
  %v201 = vand.u32 2147483647, %v200
  %v203 = vcvt.s32.f32 %v196
  %v204 = vmul.f32 %v203, %v201
  %v205 = vxor.u32 %v204, 2147483648
  %v206 = vsel %vm123, %v205, %v204
  %v207 = vsub.s32 4, %v183
  %v208 = vsel %vm123, %v207, %v183
  %v209 = vsel %vm122, %v113, %v206
  %v210 = vsel %vm122, 0, %v208
  %v211 = vcosq.f32.pop %v209
  %v212 = vsinq.f32.pop %v209
  %vm213 = vweird.f32 %v113
  %v214 = vand.u32 %v210, 3
  %vm215 = vcmp.lt.s32.totalorder %v214, 2
  %vm216 = vcmp.eq.s32.totalorder %v214, 0
  %v217 = vxor.u32 %v212, 2147483648
  %v218 = vsel %vm216, %v211, %v217
  %vm219 = vcmp.eq.s32.totalorder %v214, 2
  %v220 = vxor.u32 %v211, 2147483648
  %v221 = vsel %vm219, %v220, %v212
  %v222 = vsel %vm215, %v218, %v221
  %v223 = vsel %vm213, nan, %v222
  %v224 = vand.u32 2147483647, %v118
  %vm225 = vcmp.le.f32.partialorder %v224, 0.7853982
  %vm226 = vcmp.lt.s32.totalorder %v118, 0
  %v227 = vand.u32 %v118, 2139095040
  %v228 = vshrl.u32 %v227, 23
  %v229 = vsub.s32 %v228, 127
  %v230 = vand.u32 2147483647, %v118
  %v231 = vand.u32 %v230, 8388607
  %v232 = vor.u32 %v231, 8388608
  %v233 = vsub.s32 0, %v232
  %v234 = vadd.s32 %v229, 1
  %vm235 = vcmp.gt.s32.totalorder %v234, 0
  %v236 = vsel %vm235, %v234, 0
  %v237 = vshrl.u32 %v236, 5
  %v238 = vand.u32 %v236, 31
  %v239 = vsub.s32 32, %v238
  %v240 = vshrl.u32 683565275, %v239
  %v241 = vshll.u32 683565275, %v238
  %v242 = vshrl.u32 2475754826, %v239
  %v243 = vor.u32 %v241, %v242
  %v244 = vshll.u32 2475754826, %v238
  %v245 = vshrl.u32 2131351028, %v239
  %v246 = vor.u32 %v244, %v245
  %v247 = vshll.u32 2131351028, %v238
  %v248 = vshrl.u32 2102212464, %v239
  %v249 = vor.u32 %v247, %v248
  %v250 = vshll.u32 2102212464, %v238
  %v251 = vshrl.u32 920167782, %v239
  %v252 = vor.u32 %v250, %v251
  %v253 = vshll.u32 920167782, %v238
  %v254 = vshrl.u32 1326507024, %v239
  %v255 = vor.u32 %v253, %v254
  %vm256 = vcmp.lt.s32.totalorder %v237, 1
  %vm257 = vcmp.lt.s32.totalorder %v237, 2
  %vm258 = vcmp.lt.s32.totalorder %v237, 3
  %vm259 = vcmp.lt.s32.totalorder %v237, 4
  %v260 = vsel %vm256, %v240, %v243
  %v261 = vsel %vm259, %v249, 2102212464
  %v262 = vsel %vm258, %v246, %v261
  %v263 = vsel %vm257, %v260, %v262
  %v264 = vsel %vm256, %v243, %v246
  %v265 = vsel %vm259, %v252, 920167782
  %v266 = vsel %vm258, %v249, %v265
  %v267 = vsel %vm257, %v264, %v266
  %v268 = vsel %vm256, %v246, %v249
  %v269 = vsel %vm259, %v255, 1326507024
  %v270 = vsel %vm258, %v252, %v269
  %v271 = vsel %vm257, %v268, %v270
  %v272 = vshll.u32 %v232, 8
  %v273 = vmul.u32.u64.compose %v272, %v271
  %v274 = vextract.low.u32 %v273
  %v275 = vextract.high.u32 %v273
  %v276 = vmul.u32.u64.compose %v272, %v267
  %v277 = vextract.low.u32 %v276
  %v278 = vextract.high.u32 %v276
  %v279 = vmul.u32 %v272, %v263
  %v280 = vadd.s32 %v275, %v277
  %vm281 = vc.u32 %v275, %v277
  %v282 = vadd.s32 %v278, 1
  %v283 = vsel %vm281, %v282, %v278
  %v284 = vadd.s32 %v279, %v283
  %v285 = vadd.s32 %v284, 536870912
  %v286 = vshrl.u32 %v285, 30
  %v287 = vshll.u32 %v286, 30
  %v288 = vsub.s32 %v284, %v287
  %vm289 = vcmp.lt.s32.totalorder %v288, 0
  %v290 = vsub.s32 0, %v288
  %v291 = vsel %vm289, %v290, %v288
  %v292 = vclz %v291
  %v293 = vsub.s32 %v292, 2
  %vm294 = vcmp.gt.s32.totalorder 0, %v293
  %v295 = vsel %vm294, 0, %v293
  %v296 = vsub.s32 32, %v295
  %v297 = vshll.u32 %v288, %v295
  %v298 = vshrl.u32 %v280, %v296
  %v299 = vor.u32 %v297, %v298
  %v300 = vsub.s32 4294967266, %v295
  %v301 = vadd.s32 %v300, 127
  %v302 = vshll.u32 %v301, 23
  %v303 = vor.u32 4788187, %v302
  %v304 = vand.u32 2147483647, %v303
  %v306 = vcvt.s32.f32 %v299
  %v307 = vmul.f32 %v306, %v304
  %v308 = vxor.u32 %v307, 2147483648
  %v309 = vsel %vm226, %v308, %v307
  %v310 = vsub.s32 4, %v286
  %v311 = vsel %vm226, %v310, %v286
  %v312 = vsel %vm225, %v118, %v309
  %v313 = vsel %vm225, 0, %v311
  %v314 = vcosq.f32.pop %v312
  %v315 = vsinq.f32.pop %v312
  %vm316 = vweird.f32 %v118
  %v317 = vand.u32 %v313, 3
  %vm318 = vcmp.lt.s32.totalorder %v317, 2
  %vm319 = vcmp.eq.s32.totalorder %v317, 0
  %v320 = vxor.u32 %v315, 2147483648
  %v321 = vsel %vm319, %v314, %v320
  %vm322 = vcmp.eq.s32.totalorder %v317, 2
  %v323 = vxor.u32 %v314, 2147483648
  %v324 = vsel %vm322, %v323, %v315
  %v325 = vsel %vm318, %v321, %v324
  %v326 = vsel %vm316, nan, %v325
  %v327 = vand.u32 2147483647, %v113
  %vm328 = vcmp.le.f32.partialorder %v327, 0.7853982
  %vm329 = vcmp.lt.s32.totalorder %v113, 0
  %v330 = vand.u32 %v113, 2139095040
  %v331 = vshrl.u32 %v330, 23
  %v332 = vsub.s32 %v331, 127
  %v333 = vand.u32 2147483647, %v113
  %v334 = vand.u32 %v333, 8388607
  %v335 = vor.u32 %v334, 8388608
  %v336 = vsub.s32 0, %v335
  %v337 = vadd.s32 %v332, 1
  %vm338 = vcmp.gt.s32.totalorder %v337, 0
  %v339 = vsel %vm338, %v337, 0
  %v340 = vshrl.u32 %v339, 5
  %v341 = vand.u32 %v339, 31
  %v342 = vsub.s32 32, %v341
  %v343 = vshrl.u32 683565275, %v342
  %v344 = vshll.u32 683565275, %v341
  %v345 = vshrl.u32 2475754826, %v342
  %v346 = vor.u32 %v344, %v345
  %v347 = vshll.u32 2475754826, %v341
  %v348 = vshrl.u32 2131351028, %v342
  %v349 = vor.u32 %v347, %v348
  %v350 = vshll.u32 2131351028, %v341
  %v351 = vshrl.u32 2102212464, %v342
  %v352 = vor.u32 %v350, %v351
  %v353 = vshll.u32 2102212464, %v341
  %v354 = vshrl.u32 920167782, %v342
  %v355 = vor.u32 %v353, %v354
  %v356 = vshll.u32 920167782, %v341
  %v357 = vshrl.u32 1326507024, %v342
  %v358 = vor.u32 %v356, %v357
  %vm359 = vcmp.lt.s32.totalorder %v340, 1
  %vm360 = vcmp.lt.s32.totalorder %v340, 2
  %vm361 = vcmp.lt.s32.totalorder %v340, 3
  %vm362 = vcmp.lt.s32.totalorder %v340, 4
  %v363 = vsel %vm359, %v343, %v346
  %v364 = vsel %vm362, %v352, 2102212464
  %v365 = vsel %vm361, %v349, %v364
  %v366 = vsel %vm360, %v363, %v365
  %v367 = vsel %vm359, %v346, %v349
  %v368 = vsel %vm362, %v355, 920167782
  %v369 = vsel %vm361, %v352, %v368
  %v370 = vsel %vm360, %v367, %v369
  %v371 = vsel %vm359, %v349, %v352
  %v372 = vsel %vm362, %v358, 1326507024
  %v373 = vsel %vm361, %v355, %v372
  %v374 = vsel %vm360, %v371, %v373
  %v375 = vshll.u32 %v335, 8
  %v376 = vmul.u32.u64.compose %v375, %v374
  %v377 = vextract.low.u32 %v376
  %v378 = vextract.high.u32 %v376
  %v379 = vmul.u32.u64.compose %v375, %v370
  %v380 = vextract.low.u32 %v379
  %v381 = vextract.high.u32 %v379
  %v382 = vmul.u32 %v375, %v366
  %v383 = vadd.s32 %v378, %v380
  %vm384 = vc.u32 %v378, %v380
  %v385 = vadd.s32 %v381, 1
  %v386 = vsel %vm384, %v385, %v381
  %v387 = vadd.s32 %v382, %v386
  %v388 = vadd.s32 %v387, 536870912
  %v389 = vshrl.u32 %v388, 30
  %v390 = vshll.u32 %v389, 30
  %v391 = vsub.s32 %v387, %v390
  %vm392 = vcmp.lt.s32.totalorder %v391, 0
  %v393 = vsub.s32 0, %v391
  %v394 = vsel %vm392, %v393, %v391
  %v395 = vclz %v394
  %v396 = vsub.s32 %v395, 2
  %vm397 = vcmp.gt.s32.totalorder 0, %v396
  %v398 = vsel %vm397, 0, %v396
  %v399 = vsub.s32 32, %v398
  %v400 = vshll.u32 %v391, %v398
  %v401 = vshrl.u32 %v383, %v399
  %v402 = vor.u32 %v400, %v401
  %v403 = vsub.s32 4294967266, %v398
  %v404 = vadd.s32 %v403, 127
  %v405 = vshll.u32 %v404, 23
  %v406 = vor.u32 4788187, %v405
  %v407 = vand.u32 2147483647, %v406
  %v409 = vcvt.s32.f32 %v402
  %v410 = vmul.f32 %v409, %v407
  %v411 = vxor.u32 %v410, 2147483648
  %v412 = vsel %vm329, %v411, %v410
  %v413 = vsub.s32 4, %v389
  %v414 = vsel %vm329, %v413, %v389
  %v415 = vsel %vm328, %v113, %v412
  %v416 = vsel %vm328, 0, %v414
  %v417 = vcosq.f32.pop %v415
  %v418 = vsinq.f32.pop %v415
  %vm419 = vweird.f32 %v113
  %v420 = vadd.s32 %v416, 3
  %v421 = vand.u32 %v420, 3
  %vm422 = vcmp.lt.s32.totalorder %v421, 2
  %vm423 = vcmp.eq.s32.totalorder %v421, 0
  %v424 = vxor.u32 %v418, 2147483648
  %v425 = vsel %vm423, %v417, %v424
  %vm426 = vcmp.eq.s32.totalorder %v421, 2
  %v427 = vxor.u32 %v417, 2147483648
  %v428 = vsel %vm426, %v427, %v418
  %v429 = vsel %vm422, %v425, %v428
  %v430 = vsel %vm419, nan, %v429
  %v431 = vand.u32 2147483647, %v118
  %vm432 = vcmp.le.f32.partialorder %v431, 0.7853982
  %vm433 = vcmp.lt.s32.totalorder %v118, 0
  %v434 = vand.u32 %v118, 2139095040
  %v435 = vshrl.u32 %v434, 23
  %v436 = vsub.s32 %v435, 127
  %v437 = vand.u32 2147483647, %v118
  %v438 = vand.u32 %v437, 8388607
  %v439 = vor.u32 %v438, 8388608
  %v440 = vsub.s32 0, %v439
  %v441 = vadd.s32 %v436, 1
  %vm442 = vcmp.gt.s32.totalorder %v441, 0
  %v443 = vsel %vm442, %v441, 0
  %v444 = vshrl.u32 %v443, 5
  %v445 = vand.u32 %v443, 31
  %v446 = vsub.s32 32, %v445
  %v447 = vshrl.u32 683565275, %v446
  %v448 = vshll.u32 683565275, %v445
  %v449 = vshrl.u32 2475754826, %v446
  %v450 = vor.u32 %v448, %v449
  %v451 = vshll.u32 2475754826, %v445
  %v452 = vshrl.u32 2131351028, %v446
  %v453 = vor.u32 %v451, %v452
  %v454 = vshll.u32 2131351028, %v445
  %v455 = vshrl.u32 2102212464, %v446
  %v456 = vor.u32 %v454, %v455
  %v457 = vshll.u32 2102212464, %v445
  %v458 = vshrl.u32 920167782, %v446
  %v459 = vor.u32 %v457, %v458
  %v460 = vshll.u32 920167782, %v445
  %v461 = vshrl.u32 1326507024, %v446
  %v462 = vor.u32 %v460, %v461
  %vm463 = vcmp.lt.s32.totalorder %v444, 1
  %vm464 = vcmp.lt.s32.totalorder %v444, 2
  %vm465 = vcmp.lt.s32.totalorder %v444, 3
  %vm466 = vcmp.lt.s32.totalorder %v444, 4
  %v467 = vsel %vm463, %v447, %v450
  %v468 = vsel %vm466, %v456, 2102212464
  %v469 = vsel %vm465, %v453, %v468
  %v470 = vsel %vm464, %v467, %v469
  %v471 = vsel %vm463, %v450, %v453
  %v472 = vsel %vm466, %v459, 920167782
  %v473 = vsel %vm465, %v456, %v472
  %v474 = vsel %vm464, %v471, %v473
  %v475 = vsel %vm463, %v453, %v456
  %v476 = vsel %vm466, %v462, 1326507024
  %v477 = vsel %vm465, %v459, %v476
  %v478 = vsel %vm464, %v475, %v477
  %v479 = vshll.u32 %v439, 8
  %v480 = vmul.u32.u64.compose %v479, %v478
  %v481 = vextract.low.u32 %v480
  %v482 = vextract.high.u32 %v480
  %v483 = vmul.u32.u64.compose %v479, %v474
  %v484 = vextract.low.u32 %v483
  %v485 = vextract.high.u32 %v483
  %v486 = vmul.u32 %v479, %v470
  %v487 = vadd.s32 %v482, %v484
  %vm488 = vc.u32 %v482, %v484
  %v489 = vadd.s32 %v485, 1
  %v490 = vsel %vm488, %v489, %v485
  %v491 = vadd.s32 %v486, %v490
  %v492 = vadd.s32 %v491, 536870912
  %v493 = vshrl.u32 %v492, 30
  %v494 = vshll.u32 %v493, 30
  %v495 = vsub.s32 %v491, %v494
  %vm496 = vcmp.lt.s32.totalorder %v495, 0
  %v497 = vsub.s32 0, %v495
  %v498 = vsel %vm496, %v497, %v495
  %v499 = vclz %v498
  %v500 = vsub.s32 %v499, 2
  %vm501 = vcmp.gt.s32.totalorder 0, %v500
  %v502 = vsel %vm501, 0, %v500
  %v503 = vsub.s32 32, %v502
  %v504 = vshll.u32 %v495, %v502
  %v505 = vshrl.u32 %v487, %v503
  %v506 = vor.u32 %v504, %v505
  %v507 = vsub.s32 4294967266, %v502
  %v508 = vadd.s32 %v507, 127
  %v509 = vshll.u32 %v508, 23
  %v510 = vor.u32 4788187, %v509
  %v511 = vand.u32 2147483647, %v510
  %v513 = vcvt.s32.f32 %v506
  %v514 = vmul.f32 %v513, %v511
  %v515 = vxor.u32 %v514, 2147483648
  %v516 = vsel %vm433, %v515, %v514
  %v517 = vsub.s32 4, %v493
  %v518 = vsel %vm433, %v517, %v493
  %v519 = vsel %vm432, %v118, %v516
  %v520 = vsel %vm432, 0, %v518
  %v521 = vcosq.f32.pop %v519
  %v522 = vsinq.f32.pop %v519
  %vm523 = vweird.f32 %v118
  %v524 = vadd.s32 %v520, 3
  %v525 = vand.u32 %v524, 3
  %vm526 = vcmp.lt.s32.totalorder %v525, 2
  %vm527 = vcmp.eq.s32.totalorder %v525, 0
  %v528 = vxor.u32 %v522, 2147483648
  %v529 = vsel %vm527, %v521, %v528
  %vm530 = vcmp.eq.s32.totalorder %v525, 2
  %v531 = vxor.u32 %v521, 2147483648
  %v532 = vsel %vm530, %v531, %v522
  %v533 = vsel %vm526, %v529, %v532
  %v534 = vsel %vm523, nan, %v533
  %v535 = vld [vmem:[%s2] sm:$0xff]
  %v536 = vld [vmem:[%s2 + $0x8] sm:$0xff]
  %v537 = vld [vmem:[%s3] sm:$0xff]
  %v538 = vld [vmem:[%s3 + $0x8] sm:$0xff]
  %vm539 = vcmask 130048
  %v541 = vsel %vm539, %v430, 0
  %v544 = vsel %vm539, %v534, 0
  %546 = vmatprep.subr.mxu0 0.0
  %547 = vmatpush1.msra.mxu0 0.0
  %548 = vmatprep.subr.mxu0 0.0
  %549 = vmatpush1.msra.mxu0 0.0
  %550 = vmatprep.subr.mxu0 0.0
  %551 = vmatpush1.msra.mxu0 0.0
  %552 = vmatprep.subr.mxu0 0.0
  %553 = vmatpush1.msra.mxu0 0.0
  %554 = vmatprep.subr.mxu0 0.0
  %555 = vmatpush1.msra.mxu0 0.0
  %556 = vmatprep.subr.mxu0 0.0
  %557 = vmatpush1.msra.mxu0 0.0
  %558 = vmatprep.subr.mxu0 0.0
  %559 = vmatpush1.msra.mxu0 0.0
  %560 = vmatprep.subr.mxu0 0.0
  %561 = vmatpush1.msra.mxu0 0.0
  %562 = vmatprep.subr.mxu0 0.0
  %563 = vmatpush1.msra.mxu0 0.0
  %564 = vmatprep.subr.mxu0 0.0
  %565 = vmatpush1.msra.mxu0 0.0
  %566 = vmatprep.subr.mxu0 0.0
  %567 = vmatpush1.msra.mxu0 0.0
  %568 = vmatprep.subr.mxu0 0.0
  %569 = vmatpush1.msra.mxu0 0.0
  %570 = vmatprep.subr.mxu0 0.0
  %571 = vmatpush1.msra.mxu0 0.0
  %572 = vmatprep.subr.mxu0 0.0
  %573 = vmatpush1.msra.mxu0 0.0
  %574 = vmatprep.subr.mxu0 0.0
  %575 = vmatpush1.msra.mxu0 %v538
  %576 = vmatprep.subr.mxu0 0.0
  %577 = vmatpush1.msra.mxu0 %v537
  %578 = vmatprep.subr.mxu0 0.0
  %579 = vmatpush2.msra.mxu0 0.0
  %580 = vmatprep.subr.mxu0 0.0
  %581 = vmatpush2.msra.mxu0 0.0
  %582 = vmatprep.subr.mxu0 0.0
  %583 = vmatpush2.msra.mxu0 0.0
  %584 = vmatprep.subr.mxu0 0.0
  %585 = vmatpush2.msra.mxu0 0.0
  %586 = vmatprep.subr.mxu0 0.0
  %587 = vmatpush2.msra.mxu0 0.0
  %588 = vmatprep.subr.mxu0 0.0
  %589 = vmatpush2.msra.mxu0 0.0
  %590 = vmatprep.subr.mxu0 0.0
  %591 = vmatpush2.msra.mxu0 0.0
  %592 = vmatprep.subr.mxu0 0.0
  %593 = vmatpush2.msra.mxu0 0.0
  %594 = vmatprep.subr.mxu0 0.0
  %595 = vmatpush2.msra.mxu0 0.0
  %596 = vmatprep.subr.mxu0 0.0
  %597 = vmatpush2.msra.mxu0 0.0
  %598 = vmatprep.subr.mxu0 0.0
  %599 = vmatpush2.msra.mxu0 0.0
  %600 = vmatprep.subr.mxu0 0.0
  %601 = vmatpush2.msra.mxu0 0.0
  %602 = vmatprep.subr.mxu0 0.0
  %603 = vmatpush2.msra.mxu0 0.0
  %604 = vmatprep.subr.mxu0 0.0
  %605 = vmatpush2.msra.mxu0 0.0
  %606 = vmatprep.subr.mxu0 0.0
  %607 = vmatpush2.msra.mxu0 0.0
  %608 = vmatprep.subr.mxu0 0.0
  %609 = vmatpush2.msra.mxu0 0.0
  %610 = vmatprep.mubr.f32.mxu0 0.0
  %611 = vmatmul.mubr.f32.gmra.mxu0 %v541
  %v612 = vpop.f32.mrf.mxu0
  %v613 = vadd.f32 0.0, %v612
  %v614 = vpop.f32.mrf.mxu0
  %615 = vmatprep.mubr.f32.mxu0 0.0
  %616 = vmatmul.mubr.f32.gmra.mxu0 %v544
  %v617 = vpop.f32.mrf.mxu0
  %v618 = vadd.f32 0.0, %v617
  %v619 = vpop.f32.mrf.mxu0
  %620 = vdwg.mxu0
  %v622 = vsel %vm539, %v223, 0
  %v625 = vsel %vm539, %v326, 0
  %627 = vmatprep.subr.mxu0 0.0
  %628 = vmatpush1.msra.mxu0 0.0
  %629 = vmatprep.subr.mxu0 0.0
  %630 = vmatpush1.msra.mxu0 0.0
  %631 = vmatprep.subr.mxu0 0.0
  %632 = vmatpush1.msra.mxu0 0.0
  %633 = vmatprep.subr.mxu0 0.0
  %634 = vmatpush1.msra.mxu0 0.0
  %635 = vmatprep.subr.mxu0 0.0
  %636 = vmatpush1.msra.mxu0 0.0
  %637 = vmatprep.subr.mxu0 0.0
  %638 = vmatpush1.msra.mxu0 0.0
  %639 = vmatprep.subr.mxu0 0.0
  %640 = vmatpush1.msra.mxu0 0.0
  %641 = vmatprep.subr.mxu0 0.0
  %642 = vmatpush1.msra.mxu0 0.0
  %643 = vmatprep.subr.mxu0 0.0
  %644 = vmatpush1.msra.mxu0 0.0
  %645 = vmatprep.subr.mxu0 0.0
  %646 = vmatpush1.msra.mxu0 0.0
  %647 = vmatprep.subr.mxu0 0.0
  %648 = vmatpush1.msra.mxu0 0.0
  %649 = vmatprep.subr.mxu0 0.0
  %650 = vmatpush1.msra.mxu0 0.0
  %651 = vmatprep.subr.mxu0 0.0
  %652 = vmatpush1.msra.mxu0 0.0
  %653 = vmatprep.subr.mxu0 0.0
  %654 = vmatpush1.msra.mxu0 0.0
  %655 = vmatprep.subr.mxu0 0.0
  %656 = vmatpush1.msra.mxu0 %v536
  %657 = vmatprep.subr.mxu0 0.0
  %658 = vmatpush1.msra.mxu0 %v535
  %659 = vmatprep.subr.mxu0 0.0
  %660 = vmatpush2.msra.mxu0 0.0
  %661 = vmatprep.subr.mxu0 0.0
  %662 = vmatpush2.msra.mxu0 0.0
  %663 = vmatprep.subr.mxu0 0.0
  %664 = vmatpush2.msra.mxu0 0.0
  %665 = vmatprep.subr.mxu0 0.0
  %666 = vmatpush2.msra.mxu0 0.0
  %667 = vmatprep.subr.mxu0 0.0
  %668 = vmatpush2.msra.mxu0 0.0
  %669 = vmatprep.subr.mxu0 0.0
  %670 = vmatpush2.msra.mxu0 0.0
  %671 = vmatprep.subr.mxu0 0.0
  %672 = vmatpush2.msra.mxu0 0.0
  %673 = vmatprep.subr.mxu0 0.0
  %674 = vmatpush2.msra.mxu0 0.0
  %675 = vmatprep.subr.mxu0 0.0
  %676 = vmatpush2.msra.mxu0 0.0
  %677 = vmatprep.subr.mxu0 0.0
  %678 = vmatpush2.msra.mxu0 0.0
  %679 = vmatprep.subr.mxu0 0.0
  %680 = vmatpush2.msra.mxu0 0.0
  %681 = vmatprep.subr.mxu0 0.0
  %682 = vmatpush2.msra.mxu0 0.0
  %683 = vmatprep.subr.mxu0 0.0
  %684 = vmatpush2.msra.mxu0 0.0
  %685 = vmatprep.subr.mxu0 0.0
  %686 = vmatpush2.msra.mxu0 0.0
  %687 = vmatprep.subr.mxu0 0.0
  %688 = vmatpush2.msra.mxu0 0.0
  %689 = vmatprep.subr.mxu0 0.0
  %690 = vmatpush2.msra.mxu0 0.0
  %691 = vmatprep.mubr.f32.mxu0 0.0
  %692 = vmatmul.mubr.f32.gmra.mxu0 %v622
  %v693 = vpop.f32.mrf.mxu0
  %v694 = vadd.f32 %v613, %v693
  %v695 = vpop.f32.mrf.mxu0
  %696 = vmatprep.mubr.f32.mxu0 0.0
  %697 = vmatmul.mubr.f32.gmra.mxu0 %v625
  %v698 = vpop.f32.mrf.mxu0
  %v699 = vadd.f32 %v618, %v698
  %v700 = vpop.f32.mrf.mxu0
  %701 = vdwg.mxu0
  %v702 = vld [vmem:[%s4] sm:$0x1]
  %v704 = vlaneseq
  %v705 = vshrl.u32 %v704, 7
  %v706 = vsub.s32 0, %v705
  %v707 = vrot.slane %v702, %v706
  %v709 = vadd.f32 %v694, %v707
  %v710 = vadd.f32 %v699, %v707
  %v711 = vmax.f32 %v709, 0.0
  %v712 = vmax.f32 %v710, 0.0
  %v713 = vld [vmem:[%s5] sm:$0xff]
  %v714 = vld [vmem:[%s5 + $0x8] sm:$0xff]
  %v715 = vld [vmem:[%s5 + $0x10] sm:$0xff]
  %v716 = vld [vmem:[%s5 + $0x18] sm:$0xff]
  %v717 = vld [vmem:[%s6] sm:$0x1]
  %v719 = vlaneseq
  %v720 = vshrl.u32 %v719, 7
  %v721 = vsub.s32 0, %v720
  %v722 = vrot.slane %v717, %v721
  %vm724 = vcmask 261120
  %v726 = vsel %vm724, %v711, 0
  %v729 = vsel %vm724, %v712, 0
  %731 = vmatprep.subr.mxu0 0.0
  %732 = vmatpush1.msra.mxu0 0.0
  %733 = vmatprep.subr.mxu0 0.0
  %734 = vmatpush1.msra.mxu0 0.0
  %735 = vmatprep.subr.mxu0 0.0
  %736 = vmatpush1.msra.mxu0 0.0
  %737 = vmatprep.subr.mxu0 0.0
  %738 = vmatpush1.msra.mxu0 0.0
  %739 = vmatprep.subr.mxu0 0.0
  %740 = vmatpush1.msra.mxu0 0.0
  %741 = vmatprep.subr.mxu0 0.0
  %742 = vmatpush1.msra.mxu0 0.0
  %743 = vmatprep.subr.mxu0 0.0
  %744 = vmatpush1.msra.mxu0 0.0
  %745 = vmatprep.subr.mxu0 0.0
  %746 = vmatpush1.msra.mxu0 0.0
  %747 = vmatprep.subr.mxu0 0.0
  %748 = vmatpush1.msra.mxu0 0.0
  %749 = vmatprep.subr.mxu0 0.0
  %750 = vmatpush1.msra.mxu0 0.0
  %751 = vmatprep.subr.mxu0 0.0
  %752 = vmatpush1.msra.mxu0 0.0
  %753 = vmatprep.subr.mxu0 0.0
  %754 = vmatpush1.msra.mxu0 0.0
  %755 = vmatprep.subr.mxu0 0.0
  %756 = vmatpush1.msra.mxu0 %v716
  %757 = vmatprep.subr.mxu0 0.0
  %758 = vmatpush1.msra.mxu0 %v715
  %759 = vmatprep.subr.mxu0 0.0
  %760 = vmatpush1.msra.mxu0 %v714
  %761 = vmatprep.subr.mxu0 0.0
  %762 = vmatpush1.msra.mxu0 %v713
  %763 = vmatprep.subr.mxu0 0.0
  %764 = vmatpush2.msra.mxu0 0.0
  %765 = vmatprep.subr.mxu0 0.0
  %766 = vmatpush2.msra.mxu0 0.0
  %767 = vmatprep.subr.mxu0 0.0
  %768 = vmatpush2.msra.mxu0 0.0
  %769 = vmatprep.subr.mxu0 0.0
  %770 = vmatpush2.msra.mxu0 0.0
  %771 = vmatprep.subr.mxu0 0.0
  %772 = vmatpush2.msra.mxu0 0.0
  %773 = vmatprep.subr.mxu0 0.0
  %774 = vmatpush2.msra.mxu0 0.0
  %775 = vmatprep.subr.mxu0 0.0
  %776 = vmatpush2.msra.mxu0 0.0
  %777 = vmatprep.subr.mxu0 0.0
  %778 = vmatpush2.msra.mxu0 0.0
  %779 = vmatprep.subr.mxu0 0.0
  %780 = vmatpush2.msra.mxu0 0.0
  %781 = vmatprep.subr.mxu0 0.0
  %782 = vmatpush2.msra.mxu0 0.0
  %783 = vmatprep.subr.mxu0 0.0
  %784 = vmatpush2.msra.mxu0 0.0
  %785 = vmatprep.subr.mxu0 0.0
  %786 = vmatpush2.msra.mxu0 0.0
  %787 = vmatprep.subr.mxu0 0.0
  %788 = vmatpush2.msra.mxu0 0.0
  %789 = vmatprep.subr.mxu0 0.0
  %790 = vmatpush2.msra.mxu0 0.0
  %791 = vmatprep.subr.mxu0 0.0
  %792 = vmatpush2.msra.mxu0 0.0
  %793 = vmatprep.subr.mxu0 0.0
  %794 = vmatpush2.msra.mxu0 0.0
  %795 = vmatprep.mubr.f32.mxu0 0.0
  %796 = vmatmul.mubr.f32.gmra.mxu0 %v726
  %v797 = vpop.f32.mrf.mxu0
  %v798 = vadd.f32 %v722, %v797
  %v799 = vpop.f32.mrf.mxu0
  %800 = vmatprep.mubr.f32.mxu0 0.0
  %801 = vmatmul.mubr.f32.gmra.mxu0 %v729
  %v802 = vpop.f32.mrf.mxu0
  %v803 = vadd.f32 %v722, %v802
  %v804 = vpop.f32.mrf.mxu0
  %805 = vdwg.mxu0
  %v806 = vmax.f32 %v798, 0.0
  %v807 = vmax.f32 %v803, 0.0
  %v808 = vld [vmem:[%s7] sm:$0xff]
  %v809 = vld [vmem:[%s7 + $0x8] sm:$0xff]
  %v810 = vld [vmem:[%s7 + $0x10] sm:$0xff]
  %v811 = vld [vmem:[%s7 + $0x18] sm:$0xff]
  %v812 = vld [vmem:[%s8] sm:$0x1]
  %v814 = vlaneseq
  %v815 = vshrl.u32 %v814, 7
  %v816 = vsub.s32 0, %v815
  %v817 = vrot.slane %v812, %v816
  %v820 = vsel %vm724, %v806, 0
  %v823 = vsel %vm724, %v807, 0
  %825 = vmatprep.subr.mxu0 0.0
  %826 = vmatpush1.msra.mxu0 0.0
  %827 = vmatprep.subr.mxu0 0.0
  %828 = vmatpush1.msra.mxu0 0.0
  %829 = vmatprep.subr.mxu0 0.0
  %830 = vmatpush1.msra.mxu0 0.0
  %831 = vmatprep.subr.mxu0 0.0
  %832 = vmatpush1.msra.mxu0 0.0
  %833 = vmatprep.subr.mxu0 0.0
  %834 = vmatpush1.msra.mxu0 0.0
  %835 = vmatprep.subr.mxu0 0.0
  %836 = vmatpush1.msra.mxu0 0.0
  %837 = vmatprep.subr.mxu0 0.0
  %838 = vmatpush1.msra.mxu0 0.0
  %839 = vmatprep.subr.mxu0 0.0
  %840 = vmatpush1.msra.mxu0 0.0
  %841 = vmatprep.subr.mxu0 0.0
  %842 = vmatpush1.msra.mxu0 0.0
  %843 = vmatprep.subr.mxu0 0.0
  %844 = vmatpush1.msra.mxu0 0.0
  %845 = vmatprep.subr.mxu0 0.0
  %846 = vmatpush1.msra.mxu0 0.0
  %847 = vmatprep.subr.mxu0 0.0
  %848 = vmatpush1.msra.mxu0 0.0
  %849 = vmatprep.subr.mxu0 0.0
  %850 = vmatpush1.msra.mxu0 %v811
  %851 = vmatprep.subr.mxu0 0.0
  %852 = vmatpush1.msra.mxu0 %v810
  %853 = vmatprep.subr.mxu0 0.0
  %854 = vmatpush1.msra.mxu0 %v809
  %855 = vmatprep.subr.mxu0 0.0
  %856 = vmatpush1.msra.mxu0 %v808
  %857 = vmatprep.subr.mxu0 0.0
  %858 = vmatpush2.msra.mxu0 0.0
  %859 = vmatprep.subr.mxu0 0.0
  %860 = vmatpush2.msra.mxu0 0.0
  %861 = vmatprep.subr.mxu0 0.0
  %862 = vmatpush2.msra.mxu0 0.0
  %863 = vmatprep.subr.mxu0 0.0
  %864 = vmatpush2.msra.mxu0 0.0
  %865 = vmatprep.subr.mxu0 0.0
  %866 = vmatpush2.msra.mxu0 0.0
  %867 = vmatprep.subr.mxu0 0.0
  %868 = vmatpush2.msra.mxu0 0.0
  %869 = vmatprep.subr.mxu0 0.0
  %870 = vmatpush2.msra.mxu0 0.0
  %871 = vmatprep.subr.mxu0 0.0
  %872 = vmatpush2.msra.mxu0 0.0
  %873 = vmatprep.subr.mxu0 0.0
  %874 = vmatpush2.msra.mxu0 0.0
  %875 = vmatprep.subr.mxu0 0.0
  %876 = vmatpush2.msra.mxu0 0.0
  %877 = vmatprep.subr.mxu0 0.0
  %878 = vmatpush2.msra.mxu0 0.0
  %879 = vmatprep.subr.mxu0 0.0
  %880 = vmatpush2.msra.mxu0 0.0
  %881 = vmatprep.subr.mxu0 0.0
  %882 = vmatpush2.msra.mxu0 0.0
  %883 = vmatprep.subr.mxu0 0.0
  %884 = vmatpush2.msra.mxu0 0.0
  %885 = vmatprep.subr.mxu0 0.0
  %886 = vmatpush2.msra.mxu0 0.0
  %887 = vmatprep.subr.mxu0 0.0
  %888 = vmatpush2.msra.mxu0 0.0
  %889 = vmatprep.mubr.f32.mxu0 0.0
  %890 = vmatmul.mubr.f32.gmra.mxu0 %v820
  %v891 = vpop.f32.mrf.mxu0
  %v892 = vadd.f32 %v817, %v891
  %v893 = vpop.f32.mrf.mxu0
  %894 = vmatprep.mubr.f32.mxu0 0.0
  %895 = vmatmul.mubr.f32.gmra.mxu0 %v823
  %v896 = vpop.f32.mrf.mxu0
  %v897 = vadd.f32 %v817, %v896
  %v898 = vpop.f32.mrf.mxu0
  %899 = vdwg.mxu0
  %v900 = vmax.f32 %v892, 0.0
  %v901 = vmax.f32 %v897, 0.0
  %vm902 = vcmask 31744
  %903 = vst.msk [vmem:[%s9] sm:$0xff] %vm902, %v900
  %904 = vst.msk [vmem:[%s9 + $0x8] sm:$0xff] %vm902, %v901
  // Predicated region
  $region38: #{ffn_forward.1} parent=0 // pred_check
    _
  $region39: #{ffn_forward.1} parent=0 // pred_check_branch
    %906 = sbr.rel (0) target = $region41
  $region40: #{ffn_forward.1} parent=0 // pred_region
    _
  $region41: #{ffn_forward.1} parent=0 // pred_fallthru
    _
  // Predicated region
  $region42: #{ffn_forward.1} parent=0 // pred_check
    _
  $region43: #{ffn_forward.1} parent=0 // pred_check_branch
    %908 = sbr.rel (0) target = $region45
  $region44: #{ffn_forward.1} parent=0 // pred_region
    _
  $region45: #{ffn_forward.1} parent=0 // pred_fallthru
    _

</llo_original>
